<compile_context>
chip_gen: v7x
topology: tpu7x:2x2x1
jax: 0.10.0
libtpu: 0.0.40
codegen_flags: <defaults>
</compile_context>

<pallas_src>
import math

import jax
import jax.numpy as jnp
from jax.experimental import pallas as pl
from jax.experimental.pallas import tpu as pltpu


def unigcn2_kernel(x_ref, p_ref, w_ref, b_ref, o_ref):
    x = x_ref[...]                                                        # [N, C]
    # Fused propagation:  Xv = P @ X   (P already folds mean-agg, degE, degV)
    xv = jnp.dot(p_ref[...], x, preferred_element_type=jnp.float32)      # [N, C]
    # normalize_l2: row-wise 1/||x||; inf scale -> 0  (single EUP rsqrt)
    ss = jnp.sum(xv * xv, axis=1, keepdims=True)                         # [N, 1]
    scale = jnp.where(ss > 0.0, jax.lax.rsqrt(ss), 0.0)
    xv = xv * scale
    # Linear layer: Xv @ W_pad + b_pad  (lane-dense 128-wide padded output)
    out = jnp.dot(xv, w_ref[...], preferred_element_type=jnp.float32) + b_ref[...]
    o_ref[...] = out.astype(o_ref.dtype)


def unigcn2_forward(X, B_mat, A_mat, degE, degV, W, bias):
    """X:[N,C], B_mat:[E,N] (mean-agg operator), A_mat:[N,E] (sum-agg operator),
    degE:[E,1], degV:[N,1], W:[C,HO], bias:[HO]."""
    N, C = X.shape
    HO = W.shape[1]

    # ---- setup-time algebra (constant per graph; plain JAX glue) ----
    P = (degV * A_mat) @ (degE * B_mat)                 # [N, N] fused propagation op
    P = P.astype(jnp.float32)

    # ---- pad the output/W/bias minor dim to a lane-dense multiple of 128 ----
    HO_pad = max(128, ((HO + 127) // 128) * 128)
    W_pad = jnp.zeros((C, HO_pad), jnp.float32).at[:, :HO].set(W)
    b_pad = jnp.zeros((1, HO_pad), jnp.float32).at[:, :HO].set(bias.reshape(1, HO))

    out_pad = pl.pallas_call(
        unigcn2_kernel,
        grid=(1,),
        in_specs=[
            pl.BlockSpec((N, C), lambda i: (0, 0)),        # X
            pl.BlockSpec((N, N), lambda i: (0, 0)),        # P (degV*A @ degE*B)
            pl.BlockSpec((C, HO_pad), lambda i: (0, 0)),   # W (zero-padded to 128 lanes)
            pl.BlockSpec((1, HO_pad), lambda i: (0, 0)),   # bias (zero-padded)
        ],
        out_specs=pl.BlockSpec((N, HO_pad), lambda i: (0, 0)),
        out_shape=jax.ShapeDtypeStruct((N, HO_pad), X.dtype),
        compiler_params=pltpu.CompilerParams(dimension_semantics=("arbitrary",)),
    )(X, P, W_pad, b_pad)

    return out_pad[:, :HO]


if __name__ == "__main__":
    # ---- sizes implied by the module ----
    N = 16            # number of vertices
    E = 8             # number of hyperedges
    per_edge = 4      # incidences per hyperedge -> nnz = 32
    in_channels = 32
    heads = 8
    out_channels = 4
    HO = heads * out_channels  # 32

    # ---- deterministic hypergraph (every vertex / edge is covered) ----
    vertex = jnp.array([(2 * e + k) % N for e in range(E) for k in range(per_edge)],
                       dtype=jnp.int32)                                   # [nnz]
    edges = jnp.array([e for e in range(E) for _ in range(per_edge)],
                      dtype=jnp.int32)                                    # [nnz]
    nnz = vertex.shape[0]

    # ---- dense incidence / aggregation matrices (plain-JAX setup glue) ----
    # TODO(synk): the torch-scatter gather/scatter is expressed as dense matmul
    #             operators; for huge sparse graphs a gather-DMA kernel would be used.
    oh_v = jax.nn.one_hot(vertex, N, dtype=jnp.float32)                   # [nnz, N]
    oh_e = jax.nn.one_hot(edges, E, dtype=jnp.float32)                    # [nnz, E]
    counts = oh_e.T @ oh_v                                                # [E, N] incidence counts
    deg_e_cnt = counts.sum(axis=1, keepdims=True)                         # [E, 1]
    B_mat = counts / jnp.maximum(deg_e_cnt, 1.0)                          # scatter-'mean' operator
    A_mat = counts.T                                                      # scatter-'sum' operator

    # ---- args.degE / args.degV (UniGNN-style degree scalings) ----
    dv = oh_v.sum(axis=0).reshape(N, 1)                                   # vertex degrees
    de_mean = (counts @ dv) / jnp.maximum(deg_e_cnt, 1.0)                 # mean vertex deg per edge
    degV = jnp.where(dv > 0, dv ** -0.5, 0.0).astype(jnp.float32)         # [N, 1]
    degE = jnp.where(de_mean > 0, de_mean ** -0.5, 0.0).astype(jnp.float32)  # [E, 1]

    # ---- deterministic inputs & parameters ----
    key = jax.random.PRNGKey(0)
    kx, kw, kb = jax.random.split(key, 3)
    X = jax.random.normal(kx, (N, in_channels), dtype=jnp.float32)
    bound = 1.0 / math.sqrt(in_channels)                                  # nn.Linear default init
    W = jax.random.uniform(kw, (in_channels, HO), minval=-bound, maxval=bound,
                           dtype=jnp.float32)                             # stored as [C_in, H*O]
    bias = jax.random.uniform(kb, (HO,), minval=-bound, maxval=bound, dtype=jnp.float32)

    # ---- Pallas kernel ----
    out = unigcn2_forward(X, B_mat, A_mat, degE, degV, W, bias)
    out = jax.block_until_ready(out)

    # ---- pure-JAX reference (gather + segment ops), for verification ----
    Xve = X[vertex]                                                       # [nnz, C]
    sum_e = jax.ops.segment_sum(Xve, edges, num_segments=E)
    cnt_e = jax.ops.segment_sum(jnp.ones((nnz, 1), jnp.float32), edges, num_segments=E)
    Xe = sum_e / jnp.maximum(cnt_e, 1.0)                                  # first_aggregate='mean'
    Xe = Xe * degE
    Xev = Xe[edges]
    Xv = jax.ops.segment_sum(Xev, vertex, num_segments=N)                 # reduce='sum', dim_size=N
    Xv = Xv * degV
    norm = jnp.linalg.norm(Xv, axis=1, keepdims=True)
    Xv = Xv * jnp.where(norm > 0, 1.0 / norm, 0.0)                        # normalize_l2
    ref = Xv @ W + bias

    assert out.shape == (N, HO)
    assert jnp.allclose(out, ref, rtol=1e-4, atol=1e-4), (
        f"max abs err {jnp.max(jnp.abs(out - ref))}")
    print("KERNEL_OK")
</pallas_src>

<mosaic_0001>
module attributes {stable_mosaic.version = 11 : i64} {
  func.func @unigcn2_kernel(%arg0: i32, %arg1: memref<16x32xf32, #tpu.memory_space<vmem>>, %arg2: memref<16x16xf32, #tpu.memory_space<vmem>>, %arg3: memref<32x128xf32, #tpu.memory_space<vmem>>, %arg4: memref<1x128xf32, #tpu.memory_space<vmem>>, %arg5: memref<16x128xf32, #tpu.memory_space<vmem>>) attributes {dimension_semantics = [#tpu.dimension_semantics<arbitrary>], iteration_bounds = array<i64: 1>, scalar_prefetch = 0 : i64, scratch_operands = 0 : i64, tpu.core_type = #tpu.core_type<tc>, window_params = [{pipeline_mode = #tpu.pipeline_mode<synchronous>, transform_indices = @transform_0, window_bounds = array<i64: 16, 32>}, {pipeline_mode = #tpu.pipeline_mode<synchronous>, transform_indices = @transform_1, window_bounds = array<i64: 16, 16>}, {pipeline_mode = #tpu.pipeline_mode<synchronous>, transform_indices = @transform_2, window_bounds = array<i64: 32, 128>}, {pipeline_mode = #tpu.pipeline_mode<synchronous>, transform_indices = @transform_3, window_bounds = array<i64: 1, 128>}, {pipeline_mode = #tpu.pipeline_mode<synchronous>, transform_indices = @transform_4, window_bounds = array<i64: 16, 128>}]} {
    %c0 = arith.constant 0 : index
    %c0_0 = arith.constant 0 : index
    %0 = vector.load %arg1[%c0, %c0_0] : memref<16x32xf32, #tpu.memory_space<vmem>>, vector<16x32xf32>
    %c0_1 = arith.constant 0 : index
    %c0_2 = arith.constant 0 : index
    %1 = vector.load %arg2[%c0_1, %c0_2] : memref<16x16xf32, #tpu.memory_space<vmem>>, vector<16x16xf32>
    %cst = arith.constant dense<0.000000e+00> : vector<16x32xf32>
    %2 = tpu.matmul %1, %0, %cst {dimension_numbers = #tpu.dot_dimension_numbers<[1], [0], [0], [1], [0, 0, 1, 1], [], []>} : vector<16x16xf32>, vector<16x32xf32>, vector<16x32xf32> -> vector<16x32xf32>
    %3 = arith.mulf %2, %2 : vector<16x32xf32>
    %cst_3 = arith.constant dense<0.000000e+00> : vector<16xf32>
    %4 = vector.multi_reduction <add>, %3, %cst_3 [1] : vector<16x32xf32> to vector<16xf32>
    %5 = vector.shape_cast %4 : vector<16xf32> to vector<16x1xf32>
    %cst_4 = arith.constant 0.000000e+00 : f32
    %6 = vector.broadcast %cst_4 : f32 to vector<16x1xf32>
    %7 = arith.cmpf ogt, %5, %6 : vector<16x1xf32>
    %8 = math.rsqrt %5 : vector<16x1xf32>
    %cst_5 = arith.constant 0.000000e+00 : f32
    %9 = vector.broadcast %cst_5 : f32 to vector<16x1xf32>
    %10 = arith.select %7, %8, %9 : vector<16x1xi1>, vector<16x1xf32>
    %11 = vector.broadcast %10 : vector<16x1xf32> to vector<16x32xf32>
    %12 = arith.mulf %2, %11 : vector<16x32xf32>
    %c0_6 = arith.constant 0 : index
    %c0_7 = arith.constant 0 : index
    %13 = vector.load %arg3[%c0_6, %c0_7] : memref<32x128xf32, #tpu.memory_space<vmem>>, vector<32x128xf32>
    %cst_8 = arith.constant dense<0.000000e+00> : vector<16x128xf32>
    %14 = tpu.matmul %12, %13, %cst_8 {dimension_numbers = #tpu.dot_dimension_numbers<[1], [0], [0], [1], [0, 0, 1, 1], [], []>} : vector<16x32xf32>, vector<32x128xf32>, vector<16x128xf32> -> vector<16x128xf32>
    %c0_9 = arith.constant 0 : index
    %c0_10 = arith.constant 0 : index
    %15 = vector.load %arg4[%c0_9, %c0_10] : memref<1x128xf32, #tpu.memory_space<vmem>>, vector<1x128xf32>
    %16 = vector.broadcast %15 : vector<1x128xf32> to vector<16x128xf32>
    %17 = arith.addf %14, %16 : vector<16x128xf32>
    %c0_11 = arith.constant 0 : index
    %c0_12 = arith.constant 0 : index
    %18 = vector.load %arg5[%c0_11, %c0_12] : memref<16x128xf32, #tpu.memory_space<vmem>>, vector<16x128xf32>
    tpu.vector_store %arg5[%c0_11, %c0_12], %17 {strides = array<i32>} : memref<16x128xf32, #tpu.memory_space<vmem>>, vector<16x128xf32>,
    return
  }
  func.func @transform_0(%arg0: i32) -> (i32, i32) {
    %c0_i32 = arith.constant 0 : i32
    %c0_i32_0 = arith.constant 0 : i32
    %c0_i32_1 = arith.constant 0 : i32
    return %c0_i32, %c0_i32_0 : i32, i32
  }
  func.func @transform_1(%arg0: i32) -> (i32, i32) {
    %c0_i32 = arith.constant 0 : i32
    %c0_i32_0 = arith.constant 0 : i32
    %c0_i32_1 = arith.constant 0 : i32
    return %c0_i32, %c0_i32_0 : i32, i32
  }
  func.func @transform_2(%arg0: i32) -> (i32, i32) {
    %c0_i32 = arith.constant 0 : i32
    %c0_i32_0 = arith.constant 0 : i32
    %c0_i32_1 = arith.constant 0 : i32
    return %c0_i32, %c0_i32_0 : i32, i32
  }
  func.func @transform_3(%arg0: i32) -> (i32, i32) {
    %c0_i32 = arith.constant 0 : i32
    %c0_i32_0 = arith.constant 0 : i32
    %c0_i32_1 = arith.constant 0 : i32
    return %c0_i32, %c0_i32_0 : i32, i32
  }
  func.func @transform_4(%arg0: i32) -> (i32, i32) {
    %c0_i32 = arith.constant 0 : i32
    %c0_i32_0 = arith.constant 0 : i32
    %c0_i32_1 = arith.constant 0 : i32
    return %c0_i32, %c0_i32_0 : i32, i32
  }
}

</mosaic_0001>

<llo_original>
// kernel: tpu_custom_call.1
$region0: #{tpu_custom_call.1}
  #allocation0 [shape = 'u32[]', space=smem, size = 0x4, offset = 0x4, fixed_abs, tag = 'smem constant byte address 0x4 - core index']
  #allocation1 [shape = 'u32[144,128]{1,0:T(1,128)}', space=vmem, size = 0x12000, scoped, tag = 'internal scratch']
  %s0 = inlined_call_operand.hbm [shape: f32[16,32], index: 0, kind: input, shape index: {}]
  %s1 = inlined_call_operand.hbm [shape: f32[16,16], index: 1, kind: input, shape index: {}]
  %s2 = inlined_call_operand.hbm [shape: f32[32,128], index: 2, kind: input, shape index: {}]
  %s3 = inlined_call_operand.vmem [shape: f32[1,128], index: 3, kind: input, shape index: {}]
  %s4 = inlined_call_operand.hbm [shape: f32[16,128], index: 4, kind: output, shape index: {}]
  %s5 = sld [smem:[#allocation0]]
  $region38: #{tpu_custom_call.1} parent=0
    _
  %s7 = ssub.s32 1, %s5
  %s8 = scalar_select 0, %s7, %s5
  $region1: #{tpu_custom_call.1} parent=0
    #allocation2 [shape = 'u8[8192]{0}', space=vmem, size = 0x2000, scoped, tag = 'input window, operand 0, single buffered']
    #allocation3 [shape = 's32[1]{0}', space=sflag, size = 0x4, scoped, tag = 'scoped memory for tpu_custom_call.1']
    #allocation4 [shape = 's32[1]{0}', space=sflag, size = 0x4, scoped, tag = 'scoped memory for tpu_custom_call.1']
    #allocation5 [shape = 'u8[8192]{0}', space=vmem, size = 0x2000, scoped, tag = 'input window, operand 1, single buffered']
    #allocation6 [shape = 's32[1]{0}', space=sflag, size = 0x4, scoped, tag = 'scoped memory for tpu_custom_call.1']
    #allocation7 [shape = 'u8[16384]{0}', space=vmem, size = 0x4000, scoped, tag = 'input window, operand 2, single buffered']
    #allocation8 [shape = 'u8[8192]{0}', space=vmem, size = 0x2000, scoped, tag = 'output window, operand 0, single buffered']
    %9 = vsyncpa [#allocation3], 0
    %10 = vsyncpa [#allocation6], 0
    %11 = vsyncpa [#allocation4], 0
    // Predicated region
    $region2: #{tpu_custom_call.1} parent=1 // pred_check
      _
    $region3: #{tpu_custom_call.1} parent=1 // pred_check_branch
      %13 = sbr.rel (0) target = $region5
    $region4: #{tpu_custom_call.1} parent=1 // pred_region
      %s15 = ssub.s32 256, 256
      %16 = vsyncadd [#allocation3], %s15
      %s17 = sshll.u32 [#allocation2], 4
      %s18 = int_to_ptr.vmem [resolvable:$true] %s17
      %23 = dma.hbm_to_vmem [thread:$0]  %s0, 256, %s18, [#allocation3], 128, 128, 8
    $region5: #{tpu_custom_call.1} parent=1 // pred_fallthru
      _
    // Predicated region
    $region6: #{tpu_custom_call.1} parent=1 // pred_check
      _
    $region7: #{tpu_custom_call.1} parent=1 // pred_check_branch
      %25 = sbr.rel (0) target = $region9
    $region8: #{tpu_custom_call.1} parent=1 // pred_region
      %s27 = ssub.s32 256, 256
      %28 = vsyncadd [#allocation6], %s27
      %s29 = sshll.u32 [#allocation5], 4
      %s30 = int_to_ptr.vmem [resolvable:$true] %s29
      %35 = dma.hbm_to_vmem [thread:$0]  %s1, 256, %s30, [#allocation6], 128, 128, 8
    $region9: #{tpu_custom_call.1} parent=1 // pred_fallthru
      _
    // Predicated region
    $region10: #{tpu_custom_call.1} parent=1 // pred_check
      _
    $region11: #{tpu_custom_call.1} parent=1 // pred_check_branch
      %37 = sbr.rel (0) target = $region13
    $region12: #{tpu_custom_call.1} parent=1 // pred_region
      %s39 = ssub.s32 512, 512
      %40 = vsyncadd [#allocation6], %s39
      %s41 = sshll.u32 [#allocation7], 4
      %s42 = int_to_ptr.vmem [resolvable:$true] %s41
      %47 = dma.hbm_to_vmem [thread:$0]  %s2, 512, %s42, [#allocation6], 128, 128, 8
    $region13: #{tpu_custom_call.1} parent=1 // pred_fallthru
      _
    // Predicated region
    $region14: #{tpu_custom_call.1} parent=1 // pred_check
      _
    $region15: #{tpu_custom_call.1} parent=1 // pred_check_branch
      %49 = sbr.rel (0) target = $region17
    $region16: #{tpu_custom_call.1} parent=1 // pred_region
      _
    $region17: #{tpu_custom_call.1} parent=1 // pred_fallthru
      _
    // Predicated region
    $region18: #{tpu_custom_call.1} parent=1 // pred_check
      _
    $region19: #{tpu_custom_call.1} parent=1 // pred_check_branch
      %51 = sbr.rel (0) target = $region21
    $region20: #{tpu_custom_call.1} parent=1 // pred_region
      %52 = dma.done [#allocation3], 256
    $region21: #{tpu_custom_call.1} parent=1 // pred_fallthru
      _
    // Predicated region
    $region22: #{tpu_custom_call.1} parent=1 // pred_check
      _
    $region23: #{tpu_custom_call.1} parent=1 // pred_check_branch
      %54 = sbr.rel (0) target = $region25
    $region24: #{tpu_custom_call.1} parent=1 // pred_region
      %55 = dma.done [#allocation6], 256
    $region25: #{tpu_custom_call.1} parent=1 // pred_fallthru
      _
    // Predicated region
    $region26: #{tpu_custom_call.1} parent=1 // pred_check
      _
    $region27: #{tpu_custom_call.1} parent=1 // pred_check_branch
      %57 = sbr.rel (0) target = $region29
    $region28: #{tpu_custom_call.1} parent=1 // pred_region
      %58 = dma.done [#allocation6], 512
    $region29: #{tpu_custom_call.1} parent=1 // pred_fallthru
      _
    %v59 = vld [vmem:[#allocation2] sm:$0xff]
    %v60 = vld [vmem:[#allocation2 + $0x8] sm:$0xff]
    %v61 = vld [vmem:[#allocation5] sm:$0xff]
    %v62 = vld [vmem:[#allocation5 + $0x8] sm:$0xff]
    %vm63 = vcmask 130048
    %v65 = vsel %vm63, %v61, 0
    %v68 = vsel %vm63, %v62, 0
    %70 = vmatprep.subr.mxu0 0.0
    %71 = vmatpush1.msra.mxu0 %v59
    %72 = vmatprep.subr.mxu0 0.0
    %73 = vmatpush1.msra.mxu0 %v60
    %74 = vmatprep.subr.mxu0 0.0
    %75 = vmatpush1.msra.mxu0 0.0
    %76 = vmatprep.subr.mxu0 0.0
    %77 = vmatpush1.msra.mxu0 0.0
    %78 = vmatprep.subr.mxu0 0.0
    %79 = vmatpush1.msra.mxu0 0.0
    %80 = vmatprep.subr.mxu0 0.0
    %81 = vmatpush1.msra.mxu0 0.0
    %82 = vmatprep.subr.mxu0 0.0
    %83 = vmatpush1.msra.mxu0 0.0
    %84 = vmatprep.subr.mxu0 0.0
    %85 = vmatpush1.msra.mxu0 0.0
    %86 = vmatprep.subr.mxu0 0.0
    %87 = vmatpush1.msra.mxu0 0.0
    %88 = vmatprep.subr.mxu0 0.0
    %89 = vmatpush1.msra.mxu0 0.0
    %90 = vmatprep.subr.mxu0 0.0
    %91 = vmatpush1.msra.mxu0 0.0
    %92 = vmatprep.subr.mxu0 0.0
    %93 = vmatpush1.msra.mxu0 0.0
    %94 = vmatprep.subr.mxu0 0.0
    %95 = vmatpush1.msra.mxu0 0.0
    %96 = vmatprep.subr.mxu0 0.0
    %97 = vmatpush1.msra.mxu0 0.0
    %98 = vmatprep.subr.mxu0 0.0
    %99 = vmatpush1.msra.mxu0 0.0
    %100 = vmatprep.subr.mxu0 0.0
    %101 = vmatpush1.msra.mxu0 0.0
    %102 = vmatprep.subr.mxu0 0.0
    %103 = vmatpush1.msra.mxu0 0.0
    %104 = vmatprep.subr.mxu0 0.0
    %105 = vmatpush1.msra.mxu0 0.0
    %106 = vmatprep.subr.mxu0 0.0
    %107 = vmatpush1.msra.mxu0 0.0
    %108 = vmatprep.subr.mxu0 0.0
    %109 = vmatpush1.msra.mxu0 0.0
    %110 = vmatprep.subr.mxu0 0.0
    %111 = vmatpush1.msra.mxu0 0.0
    %112 = vmatprep.subr.mxu0 0.0
    %113 = vmatpush1.msra.mxu0 0.0
    %114 = vmatprep.subr.mxu0 0.0
    %115 = vmatpush1.msra.mxu0 0.0
    %116 = vmatprep.subr.mxu0 0.0
    %117 = vmatpush1.msra.mxu0 0.0
    %118 = vmatprep.subr.mxu0 0.0
    %119 = vmatpush1.msra.mxu0 0.0
    %120 = vmatprep.subr.mxu0 0.0
    %121 = vmatpush1.msra.mxu0 0.0
    %122 = vmatprep.subr.mxu0 0.0
    %123 = vmatpush1.msra.mxu0 0.0
    %124 = vmatprep.subr.mxu0 0.0
    %125 = vmatpush1.msra.mxu0 0.0
    %126 = vmatprep.subr.mxu0 0.0
    %127 = vmatpush1.msra.mxu0 0.0
    %128 = vmatprep.subr.mxu0 0.0
    %129 = vmatpush1.msra.mxu0 0.0
    %130 = vmatprep.subr.mxu0 0.0
    %131 = vmatpush1.msra.mxu0 0.0
    %132 = vmatprep.subr.mxu0 0.0
    %133 = vmatpush1.msra.mxu0 0.0
    %134 = vmatprep.mubr.f32.mxu0 0.0
    %135 = vmatmul.mubr.f32.gmra.mrb[0].mxu0 %v65
    %v136 = vpop.f32.mrb[0].mxu0
    %v137 = vadd.f32 0.0, %v136
    %v138 = vpop.f32.mrb[0].mxu0
    %139 = vmatprep.mubr.f32.mxu0 0.0
    %140 = vmatmul.mubr.f32.gmra.mrb[0].mxu0 %v68
    %v141 = vpop.f32.mrb[0].mxu0
    %v142 = vadd.f32 0.0, %v141
    %v143 = vpop.f32.mrb[0].mxu0
    %144 = vdwg.mxu0
    %v145 = vmul.f32 %v137, %v137
    %v146 = vmul.f32 %v142, %v142
    %vm147 = vcmask 261120
    %v148 = vsel %vm147, %v145, 0.0
    %149 = vadd.xlane.f32.xlu0 %v148
    %v150 = vpop.xlane.xlu0 %149
    %v151 = vsel %vm147, %v146, 0.0
    %152 = vadd.xlane.f32.xlu0 %v151
    %v153 = vpop.xlane.xlu0 %152
    %vm154 = vcmp.gt.f32.partialorder %v150, 0.0
    %vm155 = vcmp.gt.f32.partialorder %v153, 0.0
    %v156 = vrsqrt.pop %v150
    %v157 = vrsqrt.pop %v153
    %v158 = vsel %vm154, %v156, 0.0
    %v159 = vsel %vm155, %v157, 0.0
    %v160 = vmul.f32 %v137, %v158
    %v161 = vmul.f32 %v142, %v159
    %v162 = vld [vmem:[#allocation7] sm:$0xff]
    %v163 = vld [vmem:[#allocation7 + $0x8] sm:$0xff]
    %v164 = vld [vmem:[#allocation7 + $0x10] sm:$0xff]
    %v165 = vld [vmem:[#allocation7 + $0x18] sm:$0xff]
    %v166 = vld [vmem:[%s3] sm:$0x1]
    %v168 = vlaneseq
    %v169 = vshrl.u32 %v168, 7
    %v170 = vsub.s32 0, %v169
    %v171 = vrot.slane %v166, %v170
    %v174 = vsel %vm147, %v160, 0
    %v177 = vsel %vm147, %v161, 0
    %179 = vmatprep.subr.mxu0 0.0
    %180 = vmatpush1.msra.mxu0 %v162
    %181 = vmatprep.subr.mxu0 0.0
    %182 = vmatpush1.msra.mxu0 %v163
    %183 = vmatprep.subr.mxu0 0.0
    %184 = vmatpush1.msra.mxu0 %v164
    %185 = vmatprep.subr.mxu0 0.0
    %186 = vmatpush1.msra.mxu0 %v165
    %187 = vmatprep.subr.mxu0 0.0
    %188 = vmatpush1.msra.mxu0 0.0
    %189 = vmatprep.subr.mxu0 0.0
    %190 = vmatpush1.msra.mxu0 0.0
    %191 = vmatprep.subr.mxu0 0.0
    %192 = vmatpush1.msra.mxu0 0.0
    %193 = vmatprep.subr.mxu0 0.0
    %194 = vmatpush1.msra.mxu0 0.0
    %195 = vmatprep.subr.mxu0 0.0
    %196 = vmatpush1.msra.mxu0 0.0
    %197 = vmatprep.subr.mxu0 0.0
    %198 = vmatpush1.msra.mxu0 0.0
    %199 = vmatprep.subr.mxu0 0.0
    %200 = vmatpush1.msra.mxu0 0.0
    %201 = vmatprep.subr.mxu0 0.0
    %202 = vmatpush1.msra.mxu0 0.0
    %203 = vmatprep.subr.mxu0 0.0
    %204 = vmatpush1.msra.mxu0 0.0
    %205 = vmatprep.subr.mxu0 0.0
    %206 = vmatpush1.msra.mxu0 0.0
    %207 = vmatprep.subr.mxu0 0.0
    %208 = vmatpush1.msra.mxu0 0.0
    %209 = vmatprep.subr.mxu0 0.0
    %210 = vmatpush1.msra.mxu0 0.0
    %211 = vmatprep.subr.mxu0 0.0
    %212 = vmatpush1.msra.mxu0 0.0
    %213 = vmatprep.subr.mxu0 0.0
    %214 = vmatpush1.msra.mxu0 0.0
    %215 = vmatprep.subr.mxu0 0.0
    %216 = vmatpush1.msra.mxu0 0.0
    %217 = vmatprep.subr.mxu0 0.0
    %218 = vmatpush1.msra.mxu0 0.0
    %219 = vmatprep.subr.mxu0 0.0
    %220 = vmatpush1.msra.mxu0 0.0
    %221 = vmatprep.subr.mxu0 0.0
    %222 = vmatpush1.msra.mxu0 0.0
    %223 = vmatprep.subr.mxu0 0.0
    %224 = vmatpush1.msra.mxu0 0.0
    %225 = vmatprep.subr.mxu0 0.0
    %226 = vmatpush1.msra.mxu0 0.0
    %227 = vmatprep.subr.mxu0 0.0
    %228 = vmatpush1.msra.mxu0 0.0
    %229 = vmatprep.subr.mxu0 0.0
    %230 = vmatpush1.msra.mxu0 0.0
    %231 = vmatprep.subr.mxu0 0.0
    %232 = vmatpush1.msra.mxu0 0.0
    %233 = vmatprep.subr.mxu0 0.0
    %234 = vmatpush1.msra.mxu0 0.0
    %235 = vmatprep.subr.mxu0 0.0
    %236 = vmatpush1.msra.mxu0 0.0
    %237 = vmatprep.subr.mxu0 0.0
    %238 = vmatpush1.msra.mxu0 0.0
    %239 = vmatprep.subr.mxu0 0.0
    %240 = vmatpush1.msra.mxu0 0.0
    %241 = vmatprep.subr.mxu0 0.0
    %242 = vmatpush1.msra.mxu0 0.0
    %243 = vmatprep.mubr.f32.mxu0 0.0
    %244 = vmatmul.mubr.f32.gmra.mrb[0].mxu0 %v174
    %v245 = vpop.f32.mrb[0].mxu0
    %v246 = vadd.f32 %v171, %v245
    %v247 = vpop.f32.mrb[0].mxu0
    %248 = vmatprep.mubr.f32.mxu0 0.0
    %249 = vmatmul.mubr.f32.gmra.mrb[0].mxu0 %v177
    %v250 = vpop.f32.mrb[0].mxu0
    %v251 = vadd.f32 %v171, %v250
    %v252 = vpop.f32.mrb[0].mxu0
    %253 = vdwg.mxu0
    %254 = vst [vmem:[#allocation8] sm:$0xff] %v246
    %255 = vst [vmem:[#allocation8 + $0x8] sm:$0xff] %v251
    // Predicated region
    $region30: #{tpu_custom_call.1} parent=1 // pred_check
      _
    $region31: #{tpu_custom_call.1} parent=1 // pred_check_branch
      %257 = sbr.rel (0) target = $region33
    $region32: #{tpu_custom_call.1} parent=1 // pred_region
      %s259 = ssub.s32 256, 256
      %260 = vsyncadd [#allocation4], %s259
      %s261 = sshll.u32 [#allocation8], 4
      %s262 = int_to_ptr.vmem [resolvable:$true] %s261
      %267 = dma.vmem_to_hbm [thread:$0]  %s262, 256, %s4, [#allocation4], 128, 128, 8
    $region33: #{tpu_custom_call.1} parent=1 // pred_fallthru
      _
    // Predicated region
    $region34: #{tpu_custom_call.1} parent=1 // pred_check
      _
    $region35: #{tpu_custom_call.1} parent=1 // pred_check_branch
      %269 = sbr.rel (0) target = $region37
    $region36: #{tpu_custom_call.1} parent=1 // pred_region
      %270 = dma.done [#allocation4], 256
    $region37: #{tpu_custom_call.1} parent=1 // pred_fallthru
      _
    %271 = vsyncpa [#allocation3], 1
    %272 = vsyncpa [#allocation6], 1
    %273 = vsyncpa [#allocation4], 1

</llo_original>
